<compile_context>
chip_gen: v7x
topology: tpu7x:2x2x1
jax: 0.10.0
libtpu: 0.0.40
codegen_flags: <defaults>
</compile_context>

<pallas_src>
import functools

import jax
import jax.numpy as jnp
from jax import lax
from jax.experimental import pallas as pl
from jax.experimental.pallas import tpu as pltpu

_LANE = 128
_MAX_TM = 1024  # sublane rows per grid block; (1024,128) f32 block = 512 KiB


def _round_up(v, m):
    return ((v + m - 1) // m) * m


def _inv_sigmoid_kernel(x_ref, out_ref, *rest,
                        rev: bool, cal_jacobian: bool,
                        valid_in_last: int, tm: int):
    x = x_ref[...].astype(jnp.float32)

    if not rev:
        # torch.special.logit(x, eps): clamp to [eps, 1-eps], then log(p/(1-p))
        eps = 1e-6
        xc = jnp.clip(x, eps, 1.0 - eps)
        out = jnp.log(xc) - jnp.log1p(-xc)
        jac_in = x            # _input = x        (rev=False)
        sign = 1.0
    else:
        # torch.special.expit(x) == sigmoid(x) == 0.5*(tanh(0.5*x)+1): 1 EUP op
        out = 0.5 * (jnp.tanh(0.5 * x) + 1.0)
        jac_in = out          # _input = output   (rev=True)
        sign = -1.0

    out_ref[...] = out.astype(out_ref.dtype)

    if not cal_jacobian:
        return

    jac_ref, acc_ref = rest
    i = pl.program_id(0)
    last = pl.num_programs(0) - 1

    @pl.when(i == 0)
    def _():
        acc_ref[...] = jnp.zeros_like(acc_ref)

    # logJ = log(1/((1+exp(z))*(1+exp(-z)))) = -(softplus(z) + softplus(-z))
    #      = -(|z| + 2*log1p(exp(-|z|)))     (2 EUP ops, no overflow)
    az = jnp.abs(jac_in)
    log_j = -(az + 2.0 * jnp.log1p(jnp.exp(-az)))

    needs_mask = valid_in_last < tm * _LANE  # static (trace-time) condition
    if needs_mask:
        @pl.when(i == last)
        def _():
            row = lax.broadcasted_iota(jnp.int32, log_j.shape, 0)
            col = lax.broadcasted_iota(jnp.int32, log_j.shape, 1)
            local = row * _LANE + col
            acc_ref[...] += jnp.where(local < valid_in_last, log_j, 0.0)

        @pl.when(i != last)
        def _():
            acc_ref[...] += log_j
    else:
        acc_ref[...] += log_j

    @pl.when(i == last)
    def _():
        jac_ref[...] = sign * jnp.sum(acc_ref[...], keepdims=True)


def invertible_sigmoid(x, rev: bool = False, cal_jacobian: bool = False):
    orig_shape = x.shape
    orig_dtype = x.dtype
    n = int(x.size)

    rows = int(pl.cdiv(n, _LANE))
    if rows <= _MAX_TM:
        tm = max(8, _round_up(rows, 8))
    else:
        tm = _MAX_TM
    rows_padded = _round_up(rows, tm)
    n_pad = rows_padded * _LANE
    num_blocks = rows_padded // tm
    # number of valid (non-padded) elements in the last grid block (python int)
    valid_in_last = n - (num_blocks - 1) * tm * _LANE

    xf = x.reshape(-1)
    if n_pad != n:
        xf = jnp.pad(xf, (0, n_pad - n))
    xf = xf.reshape(rows_padded, _LANE)

    kernel = functools.partial(
        _inv_sigmoid_kernel, rev=rev, cal_jacobian=cal_jacobian,
        valid_in_last=valid_in_last, tm=tm)

    x_spec = pl.BlockSpec((tm, _LANE), lambda i: (i, 0))
    out_spec = pl.BlockSpec((tm, _LANE), lambda i: (i, 0))

    if cal_jacobian:
        out, jac = pl.pallas_call(
            kernel,
            out_shape=(
                jax.ShapeDtypeStruct((rows_padded, _LANE), orig_dtype),
                jax.ShapeDtypeStruct((1, 1), jnp.float32),
            ),
            grid_spec=pltpu.PrefetchScalarGridSpec(
                num_scalar_prefetch=0,
                grid=(num_blocks,),
                in_specs=[x_spec],
                out_specs=(
                    out_spec,
                    pl.BlockSpec((1, 1), lambda i: (0, 0)),  # resident scalar
                ),
                scratch_shapes=[pltpu.VMEM((tm, _LANE), jnp.float32)],
            ),
            compiler_params=pltpu.CompilerParams(
                # resident accumulator -> sequential grid axis
                dimension_semantics=("arbitrary",),
                vmem_limit_bytes=32 * 1024 * 1024,
            ),
        )(xf)
    else:
        out = pl.pallas_call(
            kernel,
            out_shape=jax.ShapeDtypeStruct((rows_padded, _LANE), orig_dtype),
            grid_spec=pltpu.PrefetchScalarGridSpec(
                num_scalar_prefetch=0,
                grid=(num_blocks,),
                in_specs=[x_spec],
                out_specs=out_spec,
            ),
            compiler_params=pltpu.CompilerParams(
                dimension_semantics=("parallel",),  # megacore-friendly
                vmem_limit_bytes=32 * 1024 * 1024,
            ),
        )(xf)

    if n_pad != n:
        out = out.reshape(-1)[:n].reshape(orig_shape)
    else:
        out = out.reshape(orig_shape)

    if cal_jacobian:
        return out, jac[0, 0]
    return out


def _reference(x, rev=False, cal_jacobian=False):
    """Pure-JAX reference mirroring the PyTorch module."""
    x = x.astype(jnp.float32)
    if not rev:
        eps = 1e-6
        xc = jnp.clip(x, eps, 1.0 - eps)
        out = jnp.log(xc / (1.0 - xc))
        jac_in = x
        sign = 1.0
    else:
        out = jax.nn.sigmoid(x)
        jac_in = out
        sign = -1.0
    if not cal_jacobian:
        return out
    log_j = jnp.log(1.0 / ((1.0 + jnp.exp(jac_in)) * (1.0 + jnp.exp(-jac_in))))
    return out, sign * jnp.sum(log_j)


if __name__ == "__main__":
    key = jax.random.PRNGKey(0)
    # Values in (0, 1), valid domain for the (rev=False) logit path.
    x = jax.random.uniform(key, (2, 4, 16, 16), dtype=jnp.float32,
                           minval=0.02, maxval=0.98)

    # forward (rev=False) with Jacobian
    y, jac_fwd = invertible_sigmoid(x, rev=False, cal_jacobian=True)
    # reverse (rev=True) with Jacobian, fed with the forward output
    z, jac_rev = invertible_sigmoid(y, rev=True, cal_jacobian=True)
    # plain path without Jacobian (specialized kernel, parallel grid)
    y_plain = invertible_sigmoid(x)

    jax.block_until_ready((y, jac_fwd, z, jac_rev, y_plain))

    # sanity check against pure-JAX reference
    y_ref, jac_fwd_ref = _reference(x, rev=False, cal_jacobian=True)
    z_ref, jac_rev_ref = _reference(y_ref, rev=True, cal_jacobian=True)
    assert jnp.allclose(y, y_ref, atol=1e-5, rtol=1e-5)
    assert jnp.allclose(z, z_ref, atol=1e-5, rtol=1e-5)
    assert jnp.allclose(jac_fwd, jac_fwd_ref, atol=1e-2, rtol=1e-4)
    assert jnp.allclose(jac_rev, jac_rev_ref, atol=1e-2, rtol=1e-4)
    assert jnp.allclose(y_plain, y_ref, atol=1e-5, rtol=1e-5)

    print("KERNEL_OK")
</pallas_src>

<mosaic_0001>
module attributes {stable_mosaic.version = 11 : i64} {
  func.func @_inv_sigmoid_kernel(%arg0: i32, %arg1: memref<16x128xf32, #tpu.memory_space<vmem>>, %arg2: memref<16x128xf32, #tpu.memory_space<vmem>>, %arg3: memref<1x1xf32, #tpu.memory_space<vmem>>, %arg4: memref<16x128xf32, #tpu.memory_space<vmem>>) attributes {dimension_semantics = [#tpu.dimension_semantics<arbitrary>], iteration_bounds = array<i64: 1>, scalar_prefetch = 0 : i64, scratch_operands = 1 : i64, tpu.core_type = #tpu.core_type<tc>, window_params = [{transform_indices = @transform_0, window_bounds = array<i64: 16, 128>}, {transform_indices = @transform_1, window_bounds = array<i64: 16, 128>}, {pipeline_mode = #tpu.pipeline_mode<synchronous>, transform_indices = @transform_2, window_bounds = array<i64: 1, 1>}]} {
    %c0 = arith.constant 0 : index
    %c0_0 = arith.constant 0 : index
    %0 = vector.load %arg1[%c0, %c0_0] : memref<16x128xf32, #tpu.memory_space<vmem>>, vector<16x128xf32>
    %cst = arith.constant 9.99999997E-7 : f32
    %cst_1 = arith.constant 0.999998986 : f32
    %1 = vector.broadcast %cst : f32 to vector<16x128xf32>
    %2 = arith.maximumf %1, %0 : vector<16x128xf32>
    %3 = vector.broadcast %cst_1 : f32 to vector<16x128xf32>
    %4 = arith.minimumf %3, %2 : vector<16x128xf32>
    %5 = math.log %4 : vector<16x128xf32>
    %cst_2 = arith.constant 0.000000e+00 : f32
    %6 = vector.broadcast %cst_2 : f32 to vector<16x128xf32>
    %7 = arith.subf %6, %4 : vector<16x128xf32>
    %8 = math.log1p %7 : vector<16x128xf32>
    %9 = arith.subf %5, %8 : vector<16x128xf32>
    %c0_3 = arith.constant 0 : index
    %c0_4 = arith.constant 0 : index
    %10 = vector.load %arg2[%c0_3, %c0_4] : memref<16x128xf32, #tpu.memory_space<vmem>>, vector<16x128xf32>
    tpu.vector_store %arg2[%c0_3, %c0_4], %9 {strides = array<i32>} : memref<16x128xf32, #tpu.memory_space<vmem>>, vector<16x128xf32>,
    %c0_i32 = arith.constant 0 : i32
    %11 = arith.cmpi eq, %arg0, %c0_i32 : i32
    %12 = arith.extui %11 : i1 to i32
    %c0_i32_5 = arith.constant 0 : i32
    %13 = arith.cmpi ne, %12, %c0_i32_5 : i32
    scf.if %13 {
      %cst_15 = arith.constant 0.000000e+00 : f32
      %30 = vector.broadcast %cst_15 : f32 to vector<16x128xf32>
      %c0_16 = arith.constant 0 : index
      %c0_17 = arith.constant 0 : index
      %31 = vector.load %arg4[%c0_16, %c0_17] : memref<16x128xf32, #tpu.memory_space<vmem>>, vector<16x128xf32>
      tpu.vector_store %arg4[%c0_16, %c0_17], %30 {strides = array<i32>} : memref<16x128xf32, #tpu.memory_space<vmem>>, vector<16x128xf32>,
    } else {
    }
    %14 = math.absf %0 : vector<16x128xf32>
    %cst_6 = arith.constant 0.000000e+00 : f32
    %15 = vector.broadcast %cst_6 : f32 to vector<16x128xf32>
    %16 = arith.subf %15, %14 : vector<16x128xf32>
    %17 = math.exp %16 : vector<16x128xf32>
    %18 = math.log1p %17 : vector<16x128xf32>
    %cst_7 = arith.constant 2.000000e+00 : f32
    %19 = vector.broadcast %cst_7 : f32 to vector<16x128xf32>
    %20 = arith.mulf %19, %18 : vector<16x128xf32>
    %21 = arith.addf %14, %20 : vector<16x128xf32>
    %cst_8 = arith.constant 0.000000e+00 : f32
    %22 = vector.broadcast %cst_8 : f32 to vector<16x128xf32>
    %23 = arith.subf %22, %21 : vector<16x128xf32>
    %c0_9 = arith.constant 0 : index
    %c0_10 = arith.constant 0 : index
    %24 = vector.load %arg4[%c0_9, %c0_10] : memref<16x128xf32, #tpu.memory_space<vmem>>, vector<16x128xf32>
    %25 = arith.addf %24, %23 : vector<16x128xf32>
    %c0_11 = arith.constant 0 : index
    %c0_12 = arith.constant 0 : index
    %26 = vector.load %arg4[%c0_11, %c0_12] : memref<16x128xf32, #tpu.memory_space<vmem>>, vector<16x128xf32>
    tpu.vector_store %arg4[%c0_11, %c0_12], %25 {strides = array<i32>} : memref<16x128xf32, #tpu.memory_space<vmem>>, vector<16x128xf32>,
    %c0_i32_13 = arith.constant 0 : i32
    %27 = arith.cmpi eq, %arg0, %c0_i32_13 : i32
    %28 = arith.extui %27 : i1 to i32
    %c0_i32_14 = arith.constant 0 : i32
    %29 = arith.cmpi ne, %28, %c0_i32_14 : i32
    scf.if %29 {
      %c0_15 = arith.constant 0 : index
      %c0_16 = arith.constant 0 : index
      %30 = vector.load %arg4[%c0_15, %c0_16] : memref<16x128xf32, #tpu.memory_space<vmem>>, vector<16x128xf32>
      %31 = vector.shape_cast %30 : vector<16x128xf32> to vector<1x16x128xf32>
      %cst_17 = arith.constant dense<0.000000e+00> : vector<1xf32>
      %32 = vector.multi_reduction <add>, %31, %cst_17 [1, 2] : vector<1x16x128xf32> to vector<1xf32>
      %33 = vector.shape_cast %32 : vector<1xf32> to vector<1x1x1xf32>
      %34 = vector.extract %33[0, 0, 0] : f32 from vector<1x1x1xf32>
      %35 = vector.broadcast %34 : f32 to vector<1x1xf32>
      %cst_18 = arith.constant 1.000000e+00 : f32
      %36 = vector.broadcast %cst_18 : f32 to vector<1x1xf32>
      %37 = arith.mulf %36, %35 : vector<1x1xf32>
      %c0_19 = arith.constant 0 : index
      %c0_20 = arith.constant 0 : index
      %38 = vector.load %arg3[%c0_19, %c0_20] : memref<1x1xf32, #tpu.memory_space<vmem>>, vector<1x1xf32>
      tpu.vector_store %arg3[%c0_19, %c0_20], %37 {strides = array<i32>} : memref<1x1xf32, #tpu.memory_space<vmem>>, vector<1x1xf32>,
    } else {
    }
    return
  }
  func.func @transform_0(%arg0: i32) -> (i32, i32) {
    %c0_i32 = arith.constant 0 : i32
    %c0_i32_0 = arith.constant 0 : i32
    return %arg0, %c0_i32 : i32, i32
  }
  func.func @transform_1(%arg0: i32) -> (i32, i32) {
    %c0_i32 = arith.constant 0 : i32
    %c0_i32_0 = arith.constant 0 : i32
    return %arg0, %c0_i32 : i32, i32
  }
  func.func @transform_2(%arg0: i32) -> (i32, i32) {
    %c0_i32 = arith.constant 0 : i32
    %c0_i32_0 = arith.constant 0 : i32
    %c0_i32_1 = arith.constant 0 : i32
    return %c0_i32, %c0_i32_0 : i32, i32
  }
}

</mosaic_0001>

<llo_original>
// kernel: tpu_custom_call.1
$region0: #{tpu_custom_call.1}
  #allocation0 [shape = 'u32[]', space=smem, size = 0x4, offset = 0x4, fixed_abs, tag = 'smem constant byte address 0x4 - core index']
  #allocation1 [shape = 'u32[144,128]{1,0:T(1,128)}', space=vmem, size = 0x12000, scoped, tag = 'internal scratch']
  #allocation2 [shape = 'f32[16,128]{1,0:T(8,128)}', space=vmem, size = 0x2000, scoped, tag = 'scratch operand']
  %s0 = inlined_call_operand.hbm [shape: f32[16,128], index: 0, kind: input, shape index: {}]
  %s1 = inlined_call_operand.hbm [shape: f32[16,128], index: 1, kind: output, shape index: {0}]
  %s2 = inlined_call_operand.hbm [shape: f32[1,1], index: 2, kind: output, shape index: {1}]
  %3 = xla_tuple %s1, %s2
  %s4 = sld [smem:[#allocation0]]
  $region34: #{tpu_custom_call.1} parent=0
    _
  %s6 = ssub.s32 1, %s4
  %s7 = scalar_select 0, %s6, %s4
  $region1: #{tpu_custom_call.1} parent=0
    #allocation3 [shape = 'u8[8192]{0}', space=vmem, size = 0x2000, scoped, tag = 'input window, operand 0, single buffered']
    #allocation4 [shape = 's32[1]{0}', space=sflag, size = 0x4, scoped, tag = 'scoped memory for tpu_custom_call.1']
    #allocation5 [shape = 's32[1]{0}', space=sflag, size = 0x4, scoped, tag = 'scoped memory for tpu_custom_call.1']
    #allocation6 [shape = 'u8[8192]{0}', space=vmem, size = 0x2000, scoped, tag = 'output window, operand 0, single buffered']
    #allocation7 [shape = 'u8[512]{0}', space=vmem, size = 0x400, scoped, tag = 'output window, operand 1, single buffered']
    #allocation8 [shape = 's32[1]{0}', space=sflag, size = 0x4, scoped, tag = 'scoped memory for tpu_custom_call.1']
    %8 = vsyncpa [#allocation4], 0
    %9 = vsyncpa [#allocation5], 0
    %10 = vsyncpa [#allocation8], 0
    // Predicated region
    $region2: #{tpu_custom_call.1} parent=1 // pred_check
      _
    $region3: #{tpu_custom_call.1} parent=1 // pred_check_branch
      %12 = sbr.rel (0) target = $region5
    $region4: #{tpu_custom_call.1} parent=1 // pred_region
      %s14 = ssub.s32 256, 256
      %15 = vsyncadd [#allocation4], %s14
      %s16 = sshll.u32 [#allocation3], 4
      %s17 = int_to_ptr.vmem [resolvable:$true] %s16
      %22 = dma.hbm_to_vmem [thread:$0]  %s0, 256, %s17, [#allocation4], 128, 128, 8
    $region5: #{tpu_custom_call.1} parent=1 // pred_fallthru
      _
    // Predicated region
    $region6: #{tpu_custom_call.1} parent=1 // pred_check
      _
    $region7: #{tpu_custom_call.1} parent=1 // pred_check_branch
      %24 = sbr.rel (0) target = $region9
    $region8: #{tpu_custom_call.1} parent=1 // pred_region
      %25 = dma.done [#allocation4], 256
    $region9: #{tpu_custom_call.1} parent=1 // pred_fallthru
      _
    %v26 = vld [vmem:[#allocation3] sm:$0xff]
    %v27 = vld [vmem:[#allocation3 + $0x8] sm:$0xff]
    %v28 = vmax.f32 %v26, 1e-06
    %v29 = vmax.f32 %v27, 1e-06
    %v30 = vmin.f32 %v28, 0.999999
    %v31 = vmin.f32 %v29, 0.999999
    %v32 = vlog2.pop %v30
    %v33 = vmul.f32 %v32, 0.6931472
    %v34 = vlog2.pop %v31
    %v35 = vmul.f32 %v34, 0.6931472
    %v36 = vsub.f32 0.0, %v30
    %v37 = vsub.f32 0.0, %v31
    %v38 = vadd.f32 %v36, 1.0
    %v39 = vlog2.pop %v38
    %v40 = vmul.f32 %v39, 0.6931472
    %v41 = vmul.f32 -0.5, %v36
    %v42 = vadd.f32 %v41, 1.0
    %v43 = vmul.f32 %v42, %v36
    %v44 = vand.u32 2147483647, %v36
    %vm45 = vcmp.lt.f32.partialorder %v44, 0.0004427343
    %v46 = vsel %vm45, %v43, %v40
    %v47 = vadd.f32 %v37, 1.0
    %v48 = vlog2.pop %v47
    %v49 = vmul.f32 %v48, 0.6931472
    %v50 = vmul.f32 -0.5, %v37
    %v51 = vadd.f32 %v50, 1.0
    %v52 = vmul.f32 %v51, %v37
    %v53 = vand.u32 2147483647, %v37
    %vm54 = vcmp.lt.f32.partialorder %v53, 0.0004427343
    %v55 = vsel %vm54, %v52, %v49
    %v56 = vsub.f32 %v33, %v46
    %v57 = vsub.f32 %v35, %v55
    %58 = vst [vmem:[#allocation6] sm:$0xff] %v56
    %59 = vst [vmem:[#allocation6 + $0x8] sm:$0xff] %v57
    %p60 = scmp.eq.s32.totalorder 0, 0
    // Predicated region
    $region10: #{tpu_custom_call.1} parent=1 // pred_check
      %p61 = pneg %p60
    $region11: #{tpu_custom_call.1} parent=1 // pred_check_branch
      %63 = sbr.rel (%p61) target = $region13
    $region12: #{tpu_custom_call.1} parent=1 // pred_region
      %64 = vst [vmem:[#allocation2] sm:$0xff] 0.0
      %65 = vst [vmem:[#allocation2 + $0x8] sm:$0xff] 0.0
    $region13: #{tpu_custom_call.1} parent=1 // pred_fallthru
      _
    %v66 = vand.u32 2147483647, %v26
    %v67 = vand.u32 2147483647, %v27
    %v68 = vsub.f32 0.0, %v66
    %v69 = vsub.f32 0.0, %v67
    %v70 = vmul.f32 %v68, 1.442695
    %v71 = vpow.pop %v70
    %v72 = vmul.f32 %v69, 1.442695
    %v73 = vpow.pop %v72
    %v74 = vadd.f32 %v71, 1.0
    %v75 = vlog2.pop %v74
    %v76 = vmul.f32 %v75, 0.6931472
    %v77 = vmul.f32 -0.5, %v71
    %v78 = vadd.f32 %v77, 1.0
    %v79 = vmul.f32 %v78, %v71
    %v80 = vand.u32 2147483647, %v71
    %vm81 = vcmp.lt.f32.partialorder %v80, 0.0004427343
    %v82 = vsel %vm81, %v79, %v76
    %v83 = vadd.f32 %v73, 1.0
    %v84 = vlog2.pop %v83
    %v85 = vmul.f32 %v84, 0.6931472
    %v86 = vmul.f32 -0.5, %v73
    %v87 = vadd.f32 %v86, 1.0
    %v88 = vmul.f32 %v87, %v73
    %v89 = vand.u32 2147483647, %v73
    %vm90 = vcmp.lt.f32.partialorder %v89, 0.0004427343
    %v91 = vsel %vm90, %v88, %v85
    %v92 = vmul.f32 %v82, 2.0
    %v93 = vmul.f32 %v91, 2.0
    %v94 = vadd.f32 %v66, %v92
    %v95 = vadd.f32 %v67, %v93
    %v96 = vsub.f32 0.0, %v94
    %v97 = vsub.f32 0.0, %v95
    %v98 = vld [vmem:[#allocation2] sm:$0xff]
    %v99 = vld [vmem:[#allocation2 + $0x8] sm:$0xff]
    %v100 = vadd.f32 %v98, %v96
    %v101 = vadd.f32 %v99, %v97
    %102 = vst [vmem:[#allocation2] sm:$0xff] %v100
    %103 = vst [vmem:[#allocation2 + $0x8] sm:$0xff] %v101
    // Predicated region
    $region14: #{tpu_custom_call.1} parent=1 // pred_check
      %p104 = pneg %p60
    $region15: #{tpu_custom_call.1} parent=1 // pred_check_branch
      %106 = sbr.rel (%p104) target = $region17
    $region16: #{tpu_custom_call.1} parent=1 // pred_region
      %v107 = vld [vmem:[#allocation2] sm:$0xff]
      %v108 = vld [vmem:[#allocation2 + $0x8] sm:$0xff]
      %v109 = vadd.f32 %v107, %v108
      %110 = vadd.xlane.f32.xlu0 %v109
      %v111 = vpop.xlane.xlu0 %110
      %v112 = vrot.slane %v111, 4
      %v113 = vadd.f32 %v111, %v112
      %v114 = vrot.slane %v113, 2
      %v115 = vadd.f32 %v113, %v114
      %v116 = vrot.slane %v115, 1
      %v117 = vadd.f32 %v115, %v116
      %s118 = vtos %v117
      %v119 = vstv %s118
      %vm120 = vcmask 0
      %121 = vst.msk [vmem:[#allocation7] sm:$0x1] %vm120, %v119
    $region17: #{tpu_custom_call.1} parent=1 // pred_fallthru
      _
    // Predicated region
    $region18: #{tpu_custom_call.1} parent=1 // pred_check
      _
    $region19: #{tpu_custom_call.1} parent=1 // pred_check_branch
      %123 = sbr.rel (0) target = $region21
    $region20: #{tpu_custom_call.1} parent=1 // pred_region
      %s125 = ssub.s32 256, 256
      %126 = vsyncadd [#allocation5], %s125
      %s127 = sshll.u32 [#allocation6], 4
      %s128 = int_to_ptr.vmem [resolvable:$true] %s127
      %133 = dma.vmem_to_hbm [thread:$0]  %s128, 256, %s1, [#allocation5], 128, 128, 8
    $region21: #{tpu_custom_call.1} parent=1 // pred_fallthru
      _
    // Predicated region
    $region22: #{tpu_custom_call.1} parent=1 // pred_check
      _
    $region23: #{tpu_custom_call.1} parent=1 // pred_check_branch
      %135 = sbr.rel (0) target = $region25
    $region24: #{tpu_custom_call.1} parent=1 // pred_region
      %s137 = ssub.s32 16, 16
      %138 = vsyncadd [#allocation8], %s137
      %s140 = sshll.u32 [#allocation7], 4
      %s141 = int_to_ptr.vmem [resolvable:$true] %s140
      %143 = dma.vmem_to_hbm [thread:$0]  %s141, 16, %s2, [#allocation8]
    $region25: #{tpu_custom_call.1} parent=1 // pred_fallthru
      _
    // Predicated region
    $region26: #{tpu_custom_call.1} parent=1 // pred_check
      _
    $region27: #{tpu_custom_call.1} parent=1 // pred_check_branch
      %145 = sbr.rel (0) target = $region29
    $region28: #{tpu_custom_call.1} parent=1 // pred_region
      %146 = dma.done [#allocation5], 256
    $region29: #{tpu_custom_call.1} parent=1 // pred_fallthru
      _
    // Predicated region
    $region30: #{tpu_custom_call.1} parent=1 // pred_check
      _
    $region31: #{tpu_custom_call.1} parent=1 // pred_check_branch
      %148 = sbr.rel (0) target = $region33
    $region32: #{tpu_custom_call.1} parent=1 // pred_region
      %149 = dma.done [#allocation8], 16
    $region33: #{tpu_custom_call.1} parent=1 // pred_fallthru
      _
    %150 = vsyncpa [#allocation4], 1
    %151 = vsyncpa [#allocation5], 1
    %152 = vsyncpa [#allocation8], 1

</llo_original>
